<compile_context>
chip_gen: v5e
topology: v5e:2x2
jax: 0.10.0
libtpu: 0.0.40
codegen_flags: <defaults>
</compile_context>

<pallas_src>
import functools
import math

import jax
import jax.numpy as jnp
from jax import lax
from jax.experimental import pallas as pl
from jax.experimental.pallas import tpu as pltpu

_EPS_NORM = 1e-12          # F.normalize default eps
_EPS_CLAMP = 1e-7
_SCALE = 32.0
_LO_S = (-1.0 + _EPS_CLAMP) * _SCALE   # clip-then-scale == scale-then-clip (pow2)
_HI_S = (1.0 - _EPS_CLAMP) * _SCALE


def _round_up(n, k):
    return ((n + k - 1) // k) * k


def _inv_norm(v, axis):
    # 1 / max(||v||_2, eps) == rsqrt(max(sum v^2, eps^2))  (EUP path, no divide)
    return lax.rsqrt(
        jnp.maximum(jnp.sum(v * v, axis=axis, keepdims=True),
                    _EPS_NORM * _EPS_NORM))


# ----------------------------------------------------------------------------
# Kernels
# ----------------------------------------------------------------------------
def _sphereface_cos_kernel(x_ref, w_ref, out_ref):
    """labels is None (or m == 1): scaled, clamped cosine similarity.

    x_ref: (TB, D) bf16, already L2-normalized with _SCALE folded in.
    w_ref: (D, TC) bf16, already L2-normalized (classes along lanes).
    """
    cos_s = jnp.dot(x_ref[...], w_ref[...], preferred_element_type=jnp.float32)
    out_ref[...] = jnp.clip(cos_s, _LO_S, _HI_S)


def _sphereface_margin_kernel(flags_ref, x_ref, w_ref, lbl_ref, out_ref, *,
                              m, c_tile):
    """General m: angular-margin psi on the target column, cos elsewhere.

    flags_ref: SMEM int32 (n_b * n_c,): 1 iff this (batch tile, class tile)
               contains at least one target label -> skip the epilogue otherwise.
    """
    ci = pl.program_id(0)   # class-tile index (outer)
    bi = pl.program_id(1)   # batch-tile index (inner)

    cos_s = jnp.dot(x_ref[...], w_ref[...], preferred_element_type=jnp.float32)
    cos_s = jnp.clip(cos_s, _LO_S, _HI_S)          # scaled, clamped cosine tile

    flag = flags_ref[bi * pl.num_programs(0) + ci]

    @pl.when(flag == 0)
    def _():
        # No target label lands in this class tile: plain scaled cosine.
        out_ref[...] = cos_s

    @pl.when(flag != 0)
    def _():
        # One-hot restricted to this class tile (labels offset by tile origin).
        local = lbl_ref[...] - ci * c_tile                    # (TB, 1) int32
        col = lax.broadcasted_iota(jnp.int32, cos_s.shape, 1)  # (TB, TC)
        one_hot = col == local

        # psi only for the target column (O(TB) transcendentals, not O(TB*TC)).
        # Un-scale the extracted column before arccos (exact: /2^5).
        tgt = jnp.sum(jnp.where(one_hot, cos_s, 0.0), axis=1,
                      keepdims=True) * (1.0 / _SCALE)          # (TB, 1)
        m_acos = m * jnp.arccos(tgt)
        k = jnp.floor(m_acos / math.pi).astype(jnp.int32)
        sign = jnp.where((k & 1) == 0, 1.0, -1.0)              # (-1)**k via parity
        psi = sign * jnp.cos(m_acos) - 2.0 * k.astype(jnp.float32)
        psi = jnp.clip(psi, -1.0 + _EPS_CLAMP, 1.0 - _EPS_CLAMP) * _SCALE

        out_ref[...] = jnp.where(one_hot, psi, cos_s)


# ----------------------------------------------------------------------------
# Wrapper
# ----------------------------------------------------------------------------
def sphereface_forward(x, W, labels=None, *, m=1.0, tb=512, tc=2048):
    """SphereFace.forward. x: (B, D) f32, W: (C, D) f32, labels: (B,) int or None."""
    B, D = x.shape
    C, D2 = W.shape
    assert D == D2

    use_margin = (labels is not None) and (float(m) != 1.0)

    # ---- tile sizes, capped by a per-generation VMEM budget -----------------
    TB = min(tb, _round_up(B, 8))
    TC = min(tc, _round_up(C, 128))      # lane-dense output tiles

    try:
        vmem_cap = int(pltpu.get_tpu_info().vmem_capacity_bytes)
    except Exception:  # pragma: no cover - conservative fallback (v7x-sized)
        vmem_cap = 64 * 2**20
    budget = int(0.45 * vmem_cap)        # headroom for pipeline/compiler scratch

    def _est(tb_, tc_):
        # Double-buffered footprint: bf16 x tile + bf16 W tile + f32 out tile.
        e = 2 * (tb_ * D * 2 + D * tc_ * 2 + tb_ * tc_ * 4)
        if use_margin:
            e += 2 * tb_ * 128 * 4       # (TB,1) int32 label tile pads to 128 lanes
        return e

    while _est(TB, TC) > budget and TC > 128:
        TC = max(128, _round_up(TC // 2, 128))
    while _est(TB, TC) > budget and TB > 8:
        TB = max(8, _round_up(TB // 2, 8))

    B_pad = _round_up(B, TB)
    C_pad = _round_up(C, TC)
    n_b = B_pad // TB
    n_c = C_pad // TC

    # ---- one-shot pre-normalization in the wrapper (fused XLA passes) -------
    # Exact power-of-two scale fold: bf16 rounding and f32 MXU accumulation
    # commute with *2^5, so results match the unscaled bf16 math * _SCALE.
    xs = (x * (_inv_norm(x, 1) * _SCALE)).astype(jnp.bfloat16)     # (B, D)
    if B_pad != B:
        xs = jnp.pad(xs, ((0, B_pad - B), (0, 0)))
    wt = jnp.transpose((W * _inv_norm(W, 1)).astype(jnp.bfloat16))  # (D, C) bf16
    if C_pad != C:
        wt = jnp.pad(wt, ((0, 0), (0, C_pad - C)))

    # Grid: class tiles OUTER, batch tiles INNER -> each W tile is DMA'd from
    # HBM exactly once; the (much smaller) x tiles are re-streamed per class tile.
    grid = (n_c, n_b)
    out_shape = jax.ShapeDtypeStruct((B_pad, C_pad), jnp.float32)

    vmem_limit = int(min(max(3 * _est(TB, TC), 16 * 2**20),
                         int(0.75 * vmem_cap)))
    params = pltpu.CompilerParams(
        dimension_semantics=("parallel", "parallel"),
        vmem_limit_bytes=vmem_limit,
    )

    if not use_margin:
        # m == 1: psi(theta) = cos(arccos(cos)) = cos (floor term is 0 given the
        # clamp), so the margin path degenerates to the scaled-cosine path.
        out = pl.pallas_call(
            _sphereface_cos_kernel,
            grid=grid,
            in_specs=[pl.BlockSpec((TB, D), lambda ci, bi: (bi, 0)),
                      pl.BlockSpec((D, TC), lambda ci, bi: (0, ci))],
            out_specs=pl.BlockSpec((TB, TC), lambda ci, bi: (bi, ci)),
            out_shape=out_shape,
            compiler_params=params,
        )(xs, wt)
    else:
        labels2d = labels.astype(jnp.int32).reshape(-1, 1)
        if B_pad != B:
            labels2d = jnp.pad(labels2d, ((0, B_pad - B), (0, 0)),
                               constant_values=-1)   # padded rows match nothing

        # Per-(batch tile, class tile) "contains a target" flags, flattened to 1-D
        # so the SMEM footprint stays tiny (2-D SMEM pads to multiples of (8,128)).
        lbl_tiles = labels2d.reshape(n_b, TB)
        tile_of_lbl = jnp.where(lbl_tiles >= 0, lbl_tiles // TC, -1)
        flags = (tile_of_lbl[:, :, None] ==
                 jnp.arange(n_c, dtype=jnp.int32)[None, None, :]).any(axis=1)
        flags = flags.astype(jnp.int32).reshape(-1)            # (n_b * n_c,)

        gs = pltpu.PrefetchScalarGridSpec(
            num_scalar_prefetch=1,
            grid=grid,
            in_specs=[pl.BlockSpec((TB, D), lambda ci, bi, f: (bi, 0)),
                      pl.BlockSpec((D, TC), lambda ci, bi, f: (0, ci)),
                      pl.BlockSpec((TB, 1), lambda ci, bi, f: (bi, 0))],
            out_specs=pl.BlockSpec((TB, TC), lambda ci, bi, f: (bi, ci)),
        )
        out = pl.pallas_call(
            functools.partial(_sphereface_margin_kernel, m=float(m), c_tile=TC),
            grid_spec=gs,
            out_shape=out_shape,
            compiler_params=params,
        )(flags, xs, wt, labels2d)

    if B_pad != B or C_pad != C:
        out = out[:B, :C]
    return out


# ----------------------------------------------------------------------------
# Pure-JAX references
# ----------------------------------------------------------------------------
def _reference(x, W, labels=None, m=1.0, mxu_dtype=jnp.float32):
    """Pure-JAX reference. mxu_dtype=bf16 mirrors the kernel's MXU feed."""
    xn = (x * _inv_norm(x, 1)).astype(mxu_dtype)
    wn = (W * _inv_norm(W, 1)).astype(mxu_dtype)
    cos = jnp.dot(xn, wn.T, preferred_element_type=jnp.float32)
    cos = jnp.clip(cos, -1.0 + _EPS_CLAMP, 1.0 - _EPS_CLAMP)
    if labels is None:
        return cos * _SCALE
    m_acos = m * jnp.arccos(cos)
    k = jnp.floor(m_acos / math.pi)
    psi = jnp.where(jnp.mod(k, 2.0) == 0.0, 1.0, -1.0) * jnp.cos(m_acos) - 2.0 * k
    psi = jnp.clip(psi, -1.0 + _EPS_CLAMP, 1.0 - _EPS_CLAMP)
    oh = jax.nn.one_hot(labels, cos.shape[1], dtype=cos.dtype)
    return (oh * psi + (1.0 - oh) * cos) * _SCALE


if __name__ == "__main__":
    # Small shapes; tiny tiles (tb=8, tc=128) so the (class x batch) grid really
    # has multiple steps: grid = (2, 3) with C padded 200 -> 256.
    B, D, C = 24, 32, 200

    key = jax.random.PRNGKey(0)
    kx, kw, kl = jax.random.split(key, 3)

    x = jax.random.normal(kx, (B, D), dtype=jnp.float32)
    # kaiming_uniform_(a=sqrt(5)) on (C, D): bound = 1/sqrt(fan_in)
    bound = 1.0 / math.sqrt(D)
    W = jax.random.uniform(kw, (C, D), minval=-bound, maxval=bound,
                           dtype=jnp.float32)
    labels = jax.random.randint(kl, (B,), 0, C, dtype=jnp.int32)
    labels_lo = labels % 100      # all targets in class tile 0 -> tile 1 skip path

    out_infer = sphereface_forward(x, W, None, m=1.0, tb=8, tc=128)
    out_m1 = sphereface_forward(x, W, labels, m=1.0, tb=8, tc=128)     # specialized
    out_m4 = sphereface_forward(x, W, labels, m=4.0, tb=8, tc=128)     # general psi
    out_m4_lo = sphereface_forward(x, W, labels_lo, m=4.0, tb=8, tc=128)  # flag-skip
    jax.block_until_ready((out_infer, out_m1, out_m4, out_m4_lo))

    # Precision-matched reference (same bf16 MXU feed) -> tight tolerance.
    assert jnp.allclose(out_infer, _reference(x, W, None, 1.0, jnp.bfloat16),
                        atol=2e-2), "infer path mismatch"
    assert jnp.allclose(out_m1, _reference(x, W, labels, 1.0, jnp.bfloat16),
                        atol=2e-2), "m=1 train path mismatch"
    assert jnp.allclose(out_m4, _reference(x, W, labels, 4.0, jnp.bfloat16),
                        atol=2e-2), "m=4 train path mismatch"
    assert jnp.allclose(out_m4_lo, _reference(x, W, labels_lo, 4.0, jnp.bfloat16),
                        atol=2e-2), "m=4 (skip-path) train mismatch"

    # Module-faithful full-f32 reference (loose tol: kernel feeds the MXU in bf16).
    assert jnp.allclose(out_infer, _reference(x, W, None, 1.0, jnp.float32),
                        atol=0.2), "infer vs f32 module reference mismatch"
    assert jnp.allclose(out_m1, _reference(x, W, labels, 1.0, jnp.float32),
                        atol=0.2), "train vs f32 module reference mismatch"

    print("KERNEL_OK")
</pallas_src>

<mosaic_0001>
module attributes {stable_mosaic.version = 11 : i64} {
  func.func @_sphereface_cos_kernel(%arg0: i32, %arg1: i32, %arg2: memref<8x32xbf16, #tpu.memory_space<vmem>>, %arg3: memref<32x128xbf16, #tpu.memory_space<vmem>>, %arg4: memref<8x128xf32, #tpu.memory_space<vmem>>) attributes {dimension_semantics = [#tpu.dimension_semantics<parallel>, #tpu.dimension_semantics<parallel>], iteration_bounds = array<i64: 2, 3>, scalar_prefetch = 0 : i64, scratch_operands = 0 : i64, tpu.core_type = #tpu.core_type<tc>, window_params = [{transform_indices = @transform_0, window_bounds = array<i64: 8, 32>}, {transform_indices = @transform_1, window_bounds = array<i64: 32, 128>}, {transform_indices = @transform_2, window_bounds = array<i64: 8, 128>}]} {
    %c0 = arith.constant 0 : index
    %c0_0 = arith.constant 0 : index
    %0 = vector.load %arg2[%c0, %c0_0] : memref<8x32xbf16, #tpu.memory_space<vmem>>, vector<8x32xbf16>
    %c0_1 = arith.constant 0 : index
    %c0_2 = arith.constant 0 : index
    %1 = vector.load %arg3[%c0_1, %c0_2] : memref<32x128xbf16, #tpu.memory_space<vmem>>, vector<32x128xbf16>
    %cst = arith.constant dense<0.000000e+00> : vector<8x128xf32>
    %2 = tpu.matmul %0, %1, %cst {dimension_numbers = #tpu.dot_dimension_numbers<[1], [0], [0], [1], [0, 0, 1, 1], [], []>} : vector<8x32xbf16>, vector<32x128xbf16>, vector<8x128xf32> -> vector<8x128xf32>
    %cst_3 = arith.constant -31.9999962 : f32
    %cst_4 = arith.constant 31.9999962 : f32
    %3 = vector.broadcast %cst_3 : f32 to vector<8x128xf32>
    %4 = arith.maximumf %3, %2 : vector<8x128xf32>
    %5 = vector.broadcast %cst_4 : f32 to vector<8x128xf32>
    %6 = arith.minimumf %5, %4 : vector<8x128xf32>
    %c0_5 = arith.constant 0 : index
    %c0_6 = arith.constant 0 : index
    %7 = vector.load %arg4[%c0_5, %c0_6] : memref<8x128xf32, #tpu.memory_space<vmem>>, vector<8x128xf32>
    tpu.vector_store %arg4[%c0_5, %c0_6], %6 {strides = array<i32>} : memref<8x128xf32, #tpu.memory_space<vmem>>, vector<8x128xf32>,
    return
  }
  func.func @transform_0(%arg0: i32, %arg1: i32) -> (i32, i32) {
    %c0_i32 = arith.constant 0 : i32
    %c0_i32_0 = arith.constant 0 : i32
    return %arg1, %c0_i32 : i32, i32
  }
  func.func @transform_1(%arg0: i32, %arg1: i32) -> (i32, i32) {
    %c0_i32 = arith.constant 0 : i32
    %c0_i32_0 = arith.constant 0 : i32
    return %c0_i32, %arg0 : i32, i32
  }
  func.func @transform_2(%arg0: i32, %arg1: i32) -> (i32, i32) {
    %c0_i32 = arith.constant 0 : i32
    return %arg1, %arg0 : i32, i32
  }
}

</mosaic_0001>

<llo_original>
// kernel: tpu_custom_call.1
$region0: #{tpu_custom_call.1}
  #allocation0 [shape = 'u32[]', space=smem, size = 0x4, offset = 0x4, fixed_abs, tag = 'smem constant byte address 0x4 - core index']
  #allocation1 [shape = 'u32[72,128]{1,0:T(1,128)}', space=vmem, size = 0x9000, scoped, tag = 'internal scratch']
  %s0 = inlined_call_operand.hbm [shape: bf16[24,32], index: 0, kind: input, shape index: {}]
  %s1 = inlined_call_operand.hbm [shape: bf16[32,256], index: 1, kind: input, shape index: {}]
  %s2 = inlined_call_operand.hbm [shape: f32[24,256], index: 2, kind: output, shape index: {}]
  %s3 = sld [smem:[#allocation0]]
  $region49: #{tpu_custom_call.1} parent=0
    _
  %s5 = ssub.s32 1, %s3
  %s6 = scalar_select 0, %s5, %s3
  $region1: #{tpu_custom_call.1} parent=0
    #allocation2 [shape = 'u8[4096]{0}', space=vmem, size = 0x1000, scoped, tag = 'input window, operand 0']
    #allocation3 [shape = 's32[2]{0}', space=sflag, size = 0x8, scoped, tag = 'scoped memory for tpu_custom_call.1']
    #allocation4 [shape = 's32[2]{0}', space=sflag, size = 0x8, scoped, tag = 'scoped memory for tpu_custom_call.1']
    #allocation5 [shape = 'u8[16384]{0}', space=vmem, size = 0x4000, scoped, tag = 'input window, operand 1']
    #allocation6 [shape = 's32[2]{0}', space=sflag, size = 0x8, scoped, tag = 'scoped memory for tpu_custom_call.1']
    #allocation7 [shape = 'u8[8192]{0}', space=vmem, size = 0x2000, scoped, tag = 'output window, operand 0']
    %7 = vsyncpa [#allocation3], 0
    %s8 = scalar_lea.sflag [#allocation3], 1
    %9 = vsyncpa %s8, 0
    %10 = vsyncpa [#allocation6], 0
    %s11 = scalar_lea.sflag [#allocation6], 1
    %12 = vsyncpa %s11, 0
    %13 = vsyncpa [#allocation4], 0
    %s14 = scalar_lea.sflag [#allocation4], 1
    %15 = vsyncpa %s14, 0
    loop: start=0, step=1, limit=8
    $region2: #{tpu_custom_call.1} parent=1 // loop_pre_header
      _
    $region3: #{tpu_custom_call.1} parent=1 // loop_header
      %s17 = sphi 0, %s21
      %p18 = scmp.ge.s32.totalorder %s17, 8
      %s24 = sphi 0, %s36
      %s25 = sphi 0, %s32
      %s26 = sphi 0, %s24
      %s27 = sphi 0, %s25
      %s28 = sphi 0, %s26
      %s29 = sphi 0, %s27
      %s39 = sphi 0, %s41
      %s42 = sphi 0, %s39
      %s43 = sphi 0, %s42
      %s59 = sphi 0, %s43
      %s65 = sphi 0, %s67
      %s68 = sphi 0, %s65
      %s69 = sphi 0, %s68
      %s85 = sphi 0, %s69
      %s93 = sphi 0, %s95
      %s96 = sphi 0, %s93
      %s97 = sphi 0, %s96
      %s113 = sphi 0, %s97
    $region4: #{tpu_custom_call.1} parent=1 // loop_header_branch
      %20 = sbr.rel (%p18) target = $region8
    $region5: #{tpu_custom_call.1} parent=1 // loop_body
      %s22 = ssub.s32 %s17, 1
      %s23 = ssub.s32 %s17, 2
      %s30 = sadd.s32 1, %s25
      %p31 = scmp.ge.s32.totalorder %s30, 3
      %s32 = scalar_select %p31, 0, %s30
      %s33 = sadd.s32 1, %s24
      %s34 = scalar_select %p31, %s33, %s24
      %p35 = scmp.ge.s32.totalorder %s34, 2
      %s36 = scalar_select %p35, 0, %s34
      %s37 = ssub.s32 %s25, %s32
      %p38 = scmp.eq.s32.totalorder %s37, 0
      %s40 = sadd.s32 %s39, 1
      %s41 = scalar_select %p38, %s39, %s40
      %p44 = pneg %p38
      %p45 = scmp.eq.s32.totalorder %s17, 5
      %p46 = por %p44, %p45
      %p47 = scmp.ne.s32.totalorder %s39, %s42
      %p48 = scmp.eq.s32.totalorder %s17, 0
      %p49 = por %p47, %p48
      %p50 = scmp.ne.s32.totalorder %s39, %s42
      %p51 = scmp.eq.s32.totalorder %s22, 5
      %p52 = por %p50, %p51
      %p53 = scmp.ne.s32.totalorder %s42, %s43
      %p54 = scmp.eq.s32.totalorder %s22, 0
      %p55 = por %p53, %p54
      %p56 = scmp.ne.s32.totalorder %s42, %s43
      %p57 = scmp.eq.s32.totalorder %s23, 5
      %p58 = por %p56, %p57
      %p60 = scmp.ne.s32.totalorder %s43, %s59
      %p61 = scmp.eq.s32.totalorder %s23, 0
      %p62 = por %p60, %p61
      %s63 = ssub.s32 %s24, %s36
      %p64 = scmp.eq.s32.totalorder %s63, 0
      %s66 = sadd.s32 %s65, 1
      %s67 = scalar_select %p64, %s65, %s66
      %p70 = pneg %p64
      %p71 = scmp.eq.s32.totalorder %s17, 5
      %p72 = por %p70, %p71
      %p73 = scmp.ne.s32.totalorder %s65, %s68
      %p74 = scmp.eq.s32.totalorder %s17, 0
      %p75 = por %p73, %p74
      %p76 = scmp.ne.s32.totalorder %s65, %s68
      %p77 = scmp.eq.s32.totalorder %s22, 5
      %p78 = por %p76, %p77
      %p79 = scmp.ne.s32.totalorder %s68, %s69
      %p80 = scmp.eq.s32.totalorder %s22, 0
      %p81 = por %p79, %p80
      %p82 = scmp.ne.s32.totalorder %s68, %s69
      %p83 = scmp.eq.s32.totalorder %s23, 5
      %p84 = por %p82, %p83
      %p86 = scmp.ne.s32.totalorder %s69, %s85
      %p87 = scmp.eq.s32.totalorder %s23, 0
      %p88 = por %p86, %p87
      %s89 = ssub.s32 %s25, %s32
      %s90 = ssub.s32 %s24, %s36
      %s91 = sor.u32 %s89, %s90
      %p92 = scmp.eq.s32.totalorder %s91, 0
      %s94 = sadd.s32 %s93, 1
      %s95 = scalar_select %p92, %s93, %s94
      %p98 = pneg %p92
      %p99 = scmp.eq.s32.totalorder %s17, 5
      %p100 = por %p98, %p99
      %p101 = scmp.ne.s32.totalorder %s93, %s96
      %p102 = scmp.eq.s32.totalorder %s17, 0
      %p103 = por %p101, %p102
      %p104 = scmp.ne.s32.totalorder %s93, %s96
      %p105 = scmp.eq.s32.totalorder %s22, 5
      %p106 = por %p104, %p105
      %p107 = scmp.ne.s32.totalorder %s96, %s97
      %p108 = scmp.eq.s32.totalorder %s22, 0
      %p109 = por %p107, %p108
      %p110 = scmp.ne.s32.totalorder %s96, %s97
      %p111 = scmp.eq.s32.totalorder %s23, 5
      %p112 = por %p110, %p111
      %p114 = scmp.ne.s32.totalorder %s97, %s113
      %p115 = scmp.eq.s32.totalorder %s23, 0
      %p116 = por %p114, %p115
      %p117 = scmp.le.s32.totalorder 1, %s17
      %p118 = scmp.lt.s32.totalorder %s17, 7
      %p119 = pnand %p117, %p118
      %p120 = pneg %p119
      // Predicated region
      $region9: #{tpu_custom_call.1} parent=5 // pred_check
        _
      $region10: #{tpu_custom_call.1} parent=5 // pred_check_branch
        %122 = sbr.rel (%p119) target = $region12
      $region11: #{tpu_custom_call.1} parent=5 // pred_region
        %s123 = ssub.s32 %s17, 1
      $region12: #{tpu_custom_call.1} parent=5 // pred_fallthru
        _
      %p124 = scmp.lt.s32.totalorder %s17, 6
      // Predicated region
      $region13: #{tpu_custom_call.1} parent=5 // pred_check
        %p125 = pneg %p124
      $region14: #{tpu_custom_call.1} parent=5 // pred_check_branch
        %127 = sbr.rel (%p125) target = $region16
      $region15: #{tpu_custom_call.1} parent=5 // pred_region
        // Predicated region
        $region17: #{tpu_custom_call.1} parent=15 // pred_check
          %p128 = pneg %p49
        $region18: #{tpu_custom_call.1} parent=15 // pred_check_branch
          %130 = sbr.rel (%p128) target = $region20
        $region19: #{tpu_custom_call.1} parent=15 // pred_region
          %s131 = sand.u32 %s39, 1
          %s132 = scalar_lea.sflag [#allocation3], %s131
          %s133 = sand.u32 %s39, 1
          %s134 = smul.addr %s133, 4
          %s135 = scalar_lea.vmem [#allocation2], %s134
          %137 = vsyncadd %s132, 0
          %s138 = smul.addr %s25, 4
          %s139 = scalar_lea.hbm %s0, %s138
          %s141 = sshll.u32 %s139, 4
          %s142 = int_to_ptr.hbm [resolvable:$true] %s141
          %s143 = sshll.u32 %s135, 4
          %s144 = int_to_ptr.vmem [resolvable:$true] %s143
          %146 = dma.hbm_to_vmem [thread:$0]  %s142, 64, %s144, %s132
        $region20: #{tpu_custom_call.1} parent=15 // pred_fallthru
          _
        // Predicated region
        $region21: #{tpu_custom_call.1} parent=15 // pred_check
          %p147 = pneg %p75
        $region22: #{tpu_custom_call.1} parent=15 // pred_check_branch
          %149 = sbr.rel (%p147) target = $region24
        $region23: #{tpu_custom_call.1} parent=15 // pred_region
          %s150 = sand.u32 %s65, 1
          %s151 = scalar_lea.sflag [#allocation6], %s150
          %s152 = sand.u32 %s65, 1
          %s153 = smul.addr %s152, 16
          %s154 = scalar_lea.vmem [#allocation5], %s153
          %156 = vsyncadd %s151, 0
          %s157 = smul.addr %s24, 4
          %s158 = scalar_lea.hbm %s1, %s157
          %s159 = sshll.u32 %s158, 4
          %s160 = int_to_ptr.hbm [resolvable:$true] %s159
          %s161 = sshll.u32 %s154, 4
          %s162 = int_to_ptr.vmem [resolvable:$true] %s161
          %167 = dma.hbm_to_vmem [thread:$0]  %s160, 256, %s162, %s151, 128, 64, 4
        $region24: #{tpu_custom_call.1} parent=15 // pred_fallthru
          _
      $region16: #{tpu_custom_call.1} parent=5 // pred_fallthru
        _
      %p168 = scmp.le.s32.totalorder 1, %s17
      %p169 = scmp.lt.s32.totalorder %s17, 7
      %p170 = pnand %p168, %p169
      %p171 = pneg %p170
      // Predicated region
      $region25: #{tpu_custom_call.1} parent=5 // pred_check
        _
      $region26: #{tpu_custom_call.1} parent=5 // pred_check_branch
        %173 = sbr.rel (%p170) target = $region28
      $region27: #{tpu_custom_call.1} parent=5 // pred_region
        %s174 = ssub.s32 %s17, 1
        %s175 = sand.u32 %s42, 1
        %s176 = scalar_lea.sflag [#allocation3], %s175
        %s177 = sand.u32 %s42, 1
        %s178 = smul.addr %s177, 4
        %s179 = scalar_lea.vmem [#allocation2], %s178
        // Predicated region
        $region29: #{tpu_custom_call.1} parent=27 // pred_check
          %p180 = pneg %p55
        $region30: #{tpu_custom_call.1} parent=27 // pred_check_branch
          %182 = sbr.rel (%p180) target = $region32
        $region31: #{tpu_custom_call.1} parent=27 // pred_region
          %184 = dma.done %s176, 64
        $region32: #{tpu_custom_call.1} parent=27 // pred_fallthru
          _
        %s185 = sand.u32 %s68, 1
        %s186 = scalar_lea.sflag [#allocation6], %s185
        %s187 = sand.u32 %s68, 1
        %s188 = smul.addr %s187, 16
        %s189 = scalar_lea.vmem [#allocation5], %s188
        // Predicated region
        $region33: #{tpu_custom_call.1} parent=27 // pred_check
          %p190 = pneg %p81
        $region34: #{tpu_custom_call.1} parent=27 // pred_check_branch
          %192 = sbr.rel (%p190) target = $region36
        $region35: #{tpu_custom_call.1} parent=27 // pred_region
          %194 = dma.done %s186, 256
        $region36: #{tpu_custom_call.1} parent=27 // pred_fallthru
          _
        %s195 = sand.u32 %s42, 1
        %s196 = scalar_lea.sflag [#allocation3], %s195
        %s197 = sand.u32 %s42, 1
        %s198 = smul.addr %s197, 4
        %s199 = scalar_lea.vmem [#allocation2], %s198
        %p200 = pneg %p55
        %p201 = pneg %p52
        %s202 = sand.u32 %s68, 1
        %s203 = scalar_lea.sflag [#allocation6], %s202
        %s204 = sand.u32 %s68, 1
        %s205 = smul.addr %s204, 16
        %s206 = scalar_lea.vmem [#allocation5], %s205
        %p207 = pneg %p81
        %p208 = pneg %p78
        %p209 = pneg %p109
        %p210 = pneg %p106
        %s211 = sand.u32 %s96, 1
        %s212 = scalar_lea.sflag [#allocation4], %s211
        %s213 = sand.u32 %s96, 1
        %s214 = smul.addr %s213, 8
        %s215 = scalar_lea.vmem [#allocation7], %s214
        %v217 = vld [vmem:[%s179] sm:$0xf]
        %v218 = vld [vmem:[%s189] sm:$0xf]
        %v219 = vld [vmem:[%s189 + $0x4] sm:$0xf]
        %v220 = vld [vmem:[%s189 + $0x8] sm:$0xf]
        %v221 = vld [vmem:[%s189 + $0xc] sm:$0xf]
        %v226 = vunpack.c.l.b16 %v218
        %v227 = vunpack.c.l.b16 %v219
        %v228 = vunpack.c.l.b16 %v220
        %v229 = vunpack.c.l.b16 %v221
        %v230 = vpack.c.b16 %v227, %v226
        %v231 = vpack.c.b16 %v229, %v228
        %vm234 = vcmask 261120
        %v236 = vsel %vm234, %v217, 0
        %238 = vmatpush.bf16.msra.mxu0 0
        %239 = vmatpush.bf16.msra.mxu0 0
        %240 = vmatpush.bf16.msra.mxu0 0
        %241 = vmatpush.bf16.msra.mxu0 0
        %242 = vmatpush.bf16.msra.mxu0 0
        %243 = vmatpush.bf16.msra.mxu0 0
        %244 = vmatpush.bf16.msra.mxu0 %v231
        %245 = vmatpush.bf16.msra.mxu0 %v230
        %246 = vmatmul.bf16.gmra.mxu0 %v236
        %v247 = vpop.f32.mrf.mxu0
        %v248 = vadd.f32 0.0, %v247
        %v249 = vpop.f32.mrf.mxu0
        %250 = vdwg.mxu0
        %v251 = vmax.f32 %v248, -31.999996
        %v252 = vmin.f32 %v251, 31.999996
        %253 = vst [vmem:[%s215] sm:$0xff] %v252
        %s254 = sand.u32 %s96, 1
        %s255 = scalar_lea.sflag [#allocation4], %s254
        %s256 = sand.u32 %s96, 1
        %s257 = smul.addr %s256, 8
        %s258 = scalar_lea.vmem [#allocation7], %s257
        // Predicated region
        $region37: #{tpu_custom_call.1} parent=27 // pred_check
          %p259 = pneg %p106
        $region38: #{tpu_custom_call.1} parent=27 // pred_check_branch
          %261 = sbr.rel (%p259) target = $region40
        $region39: #{tpu_custom_call.1} parent=27 // pred_region
          %263 = vsyncadd %s255, 0
          %s264 = smul.addr %s27, 2
          %s265 = sadd.s32 %s26, %s264
          %s266 = smul.addr %s265, 8
          %s267 = scalar_lea.hbm %s2, %s266
          %s269 = sshll.u32 %s258, 4
          %s270 = int_to_ptr.vmem [resolvable:$true] %s269
          %s271 = sshll.u32 %s267, 4
          %s272 = int_to_ptr.hbm [resolvable:$true] %s271
          %274 = dma.vmem_to_hbm [thread:$0]  %s270, 128, %s272, %s255
        $region40: #{tpu_custom_call.1} parent=27 // pred_fallthru
          _
      $region28: #{tpu_custom_call.1} parent=5 // pred_fallthru
        _
      %p275 = scmp.le.s32.totalorder 2, %s17
      // Predicated region
      $region41: #{tpu_custom_call.1} parent=5 // pred_check
        %p276 = pneg %p275
      $region42: #{tpu_custom_call.1} parent=5 // pred_check_branch
        %278 = sbr.rel (%p276) target = $region44
      $region43: #{tpu_custom_call.1} parent=5 // pred_region
        %s279 = ssub.s32 %s17, 2
        // Predicated region
        $region45: #{tpu_custom_call.1} parent=43 // pred_check
          %p280 = pneg %p112
        $region46: #{tpu_custom_call.1} parent=43 // pred_check_branch
          %282 = sbr.rel (%p280) target = $region48
        $region47: #{tpu_custom_call.1} parent=43 // pred_region
          %s283 = sand.u32 %s97, 1
          %s284 = scalar_lea.sflag [#allocation4], %s283
          %s285 = sand.u32 %s97, 1
          %s286 = smul.addr %s285, 8
          %s287 = scalar_lea.vmem [#allocation7], %s286
          %289 = dma.done %s284, 128
        $region48: #{tpu_custom_call.1} parent=43 // pred_fallthru
          _
      $region44: #{tpu_custom_call.1} parent=5 // pred_fallthru
        _
    $region6: #{tpu_custom_call.1} parent=1 // loop_footer
      %s21 = sadd.s32 1, %s17
    $region7: #{tpu_custom_call.1} parent=1 // loop_footer_branch
      %16 = sbr.rel target = $region3
    $region8: #{tpu_custom_call.1} parent=1 // loop_exit
      _
    %290 = vsyncpa [#allocation3], 1
    %s291 = scalar_lea.sflag [#allocation3], 1
    %292 = vsyncpa %s291, 1
    %293 = vsyncpa [#allocation6], 1
    %s294 = scalar_lea.sflag [#allocation6], 1
    %295 = vsyncpa %s294, 1
    %296 = vsyncpa [#allocation4], 1
    %s297 = scalar_lea.sflag [#allocation4], 1
    %298 = vsyncpa %s297, 1

</llo_original>
